<compile_context>
chip_gen: v5e
topology: v5e:2x2
jax: 0.10.0
libtpu: 0.0.40
codegen_flags: <defaults>
</compile_context>

<pallas_src>
import functools

import jax
import jax.numpy as jnp
from jax import lax
from jax.experimental import pallas as pl
from jax.experimental.pallas import tpu as pltpu

GAMMA = 2
IGNORE_INDEX = 255
SIZE_AVERAGE = True
_LANES = 128
# alpha (per-class weight) is None in the reference module -> no weighting.


def _focal_loss_kernel(logits_ref, target_ref, out_ref, *, num_classes, gamma,
                       ignore_index, rows_valid, n_inner, t_rows):
    # logits_ref: (C, T_ROWS, 128) in the input dtype -- pixels on lanes
    # target_ref: (T_ROWS, 128) integer labels (narrow dtype kept for DMA)
    # out_ref:    (T_ROWS, 128) f32, resident accumulator across the inner axis
    o = pl.program_id(1)
    i = pl.program_id(2)

    @pl.when(i == 0)
    def _():
        out_ref[...] = jnp.zeros_like(out_ref)

    tgt = target_ref[...].astype(jnp.int32)               # (T, 128)

    # Pass 1: per-pixel max over classes (streamed; no (C,T,128) temporary).
    m = logits_ref[0]
    for ci in range(1, num_classes):
        m = jnp.maximum(m, logits_ref[ci])
    m = m.astype(jnp.float32)                              # (T, 128)

    # Pass 2: sum of exps + target-class logit via unrolled one-hot select.
    sum_e = jnp.zeros_like(m)
    logit_t = jnp.zeros_like(m)
    for ci in range(num_classes):
        l_ci = logits_ref[ci].astype(jnp.float32)
        sum_e = sum_e + jnp.exp(l_ci - m)
        logit_t = logit_t + jnp.where(tgt == ci, l_ci, 0.0)

    # Cross-entropy + focal modulation (exact: pt = exp(-logpt)).
    logpt = jnp.log(sum_e) + m - logit_t                   # (T, 128)
    pt = jnp.exp(-logpt)
    if gamma == 2:
        focal = (1.0 - pt) * (1.0 - pt)
    else:
        focal = (1.0 - pt) ** gamma

    # Validity mask: (a) rows inside the real pixel range -- the cdiv grid's
    # last block over-reads and garbage lanes (possibly NaN/Inf) are discarded
    # here (select does not propagate the unselected operand); (b) not
    # ignore_index (PyTorch CE with reduction='none' gives 0 there).
    blk = o * n_inner + i                                  # unclamped block id
    row0 = blk * t_rows
    row_ids = row0 + lax.broadcasted_iota(jnp.int32, (t_rows, _LANES), 0)
    valid = (row_ids < rows_valid) & (tgt != ignore_index)
    out_ref[...] += jnp.where(valid, focal * logpt, 0.0)


def _vmem_limit_bytes():
    # Generation-aware VMEM budget: ~65% of physical (~41 MiB on v7x's 64 MiB,
    # ~83 MiB on v5e/v6e's 128 MiB), with a conservative fallback.
    phys = 128 * 1024 * 1024
    try:
        info = pltpu.get_tpu_info()
        phys = int(getattr(info, "vmem_capacity_bytes", phys)) or phys
    except Exception:
        pass
    return max(32 * 1024 * 1024, int(phys * 0.65))


def _pick_tile_rows(c, rows, logits_itemsize, tgt_itemsize, vmem_limit):
    # VMEM bytes per 128-pixel row: double-buffered logits + target tiles, the
    # resident f32 accumulator, and ~12 f32 in-kernel temporaries
    # (m, sum_e, logit_t, upcast target, exp/select transients, masks).
    per_row = _LANES * (2 * c * logits_itemsize + 2 * tgt_itemsize
                        + 2 * 4 + 12 * 4)
    budget = int(vmem_limit * 0.55)
    t_rows = budget // per_row
    # Sublane alignment: 8 for f32, 16 for bf16, 32 when int8 data is involved.
    align = 8
    if logits_itemsize == 2:
        align = 16
    if logits_itemsize == 1 or tgt_itemsize == 1:
        align = 32
    elif tgt_itemsize == 2:
        align = max(align, 16)
    t_rows = min(t_rows, 2048)
    t_rows = max(align, (t_rows // align) * align)
    if t_rows >= rows:
        t_rows = rows          # block == full dim: always a legal block shape
    return t_rows


def focal_loss(output, target, *, gamma=GAMMA, ignore_index=IGNORE_INDEX,
               size_average=SIZE_AVERAGE, tile_rows=None):
    """output: (N, C, H, W) float logits; target: (N, H, W) integer labels."""
    n, c, h, w = output.shape
    s = h * w
    total_px = n * s

    logits = output.reshape(n, c, s)          # free reshape of contiguous NCHW
    tgt = target.reshape(n, s)
    if (not jnp.issubdtype(tgt.dtype, jnp.integer)) or tgt.dtype.itemsize > 4:
        tgt = tgt.astype(jnp.int32)           # e.g. int64 labels
    # (uint8 / int16 / int32 labels are kept narrow for the DMA.)

    rows = pl.cdiv(s, _LANES)                 # number of 128-pixel rows/image
    s_pad = rows * _LANES
    if s_pad != s:
        # Only needed for the free lane reshape when H*W % 128 != 0 (pads by
        # < 128 pixels).  All tile-level padding is copy-free (cdiv grid +
        # in-kernel row mask).
        logits = jnp.pad(logits, ((0, 0), (0, 0), (0, s_pad - s)))
        tgt = jnp.pad(tgt, ((0, 0), (0, s_pad - s)),
                      constant_values=ignore_index)

    logits = logits.reshape(n, c, rows, _LANES)
    tgt = tgt.reshape(n, rows, _LANES)

    vmem_limit = _vmem_limit_bytes()
    if tile_rows is None:
        t_rows = _pick_tile_rows(c, rows, jnp.dtype(logits.dtype).itemsize,
                                 jnp.dtype(tgt.dtype).itemsize, vmem_limit)
    else:
        t_rows = min(rows, max(8, tile_rows))

    nblocks = pl.cdiv(rows, t_rows)
    # Split the pixel-block axis into (outer parallel, inner arbitrary) so
    # both v7x TensorCores have work even when N == 1.
    n_outer = 2 if nblocks >= 2 else 1
    n_inner = pl.cdiv(nblocks, n_outer)
    last_blk = nblocks - 1

    # Clamp the block index so a redundant trailing block (when
    # n_outer * n_inner > nblocks) re-reads an in-bounds tile; its rows fail
    # the in-kernel row mask and contribute exactly 0.
    def logits_map(b, o, i):
        return (b, 0, jnp.minimum(o * n_inner + i, last_blk), 0)

    def target_map(b, o, i):
        return (b, jnp.minimum(o * n_inner + i, last_blk), 0)

    def out_map(b, o, i):
        return (b, o, 0, 0)

    kernel = functools.partial(
        _focal_loss_kernel, num_classes=c, gamma=gamma,
        ignore_index=ignore_index, rows_valid=rows, n_inner=n_inner,
        t_rows=t_rows)

    partials = pl.pallas_call(
        kernel,
        out_shape=jax.ShapeDtypeStruct((n, n_outer, t_rows, _LANES),
                                       jnp.float32),
        grid_spec=pltpu.PrefetchScalarGridSpec(
            num_scalar_prefetch=0,
            grid=(n, n_outer, n_inner),
            in_specs=[
                pl.BlockSpec((None, c, t_rows, _LANES), logits_map),
                pl.BlockSpec((None, t_rows, _LANES), target_map),
            ],
            out_specs=pl.BlockSpec((None, None, t_rows, _LANES), out_map),
        ),
        compiler_params=pltpu.CompilerParams(
            dimension_semantics=("parallel", "parallel", "arbitrary"),
            vmem_limit_bytes=vmem_limit,
        ),
    )(logits, tgt)

    total = jnp.sum(partials)
    if size_average:
        # torch .mean() divides by N*H*W, ignored pixels included.
        return total / jnp.float32(total_px)
    return total


def _focal_loss_ref(output, target, gamma=GAMMA, ignore_index=IGNORE_INDEX,
                    size_average=SIZE_AVERAGE):
    """Plain-JAX reference for verification."""
    n, c, h, w = output.shape
    logits = jnp.transpose(output, (0, 2, 3, 1)).reshape(-1, c).astype(jnp.float32)
    tgt = target.reshape(-1).astype(jnp.int32)
    lse = jax.scipy.special.logsumexp(logits, axis=-1)
    safe_tgt = jnp.where(tgt == ignore_index, 0, tgt)
    logit_t = jnp.take_along_axis(logits, safe_tgt[:, None], axis=-1)[:, 0]
    logpt = jnp.where(tgt == ignore_index, 0.0, lse - logit_t)
    pt = jnp.exp(-logpt)
    loss = (1.0 - pt) ** gamma * logpt
    return loss.mean() if size_average else loss.sum()


if __name__ == "__main__":
    key = jax.random.PRNGKey(0)
    k1, k2, k3 = jax.random.split(key, 3)

    N, C, H, W = 2, 4, 16, 16
    output = jax.random.normal(k1, (N, C, H, W), dtype=jnp.float32)
    target = jax.random.randint(k2, (N, H, W), 0, C, dtype=jnp.int32)
    # Sprinkle some ignore_index pixels.
    ignore_mask = jax.random.bernoulli(k3, 0.1, (N, H, W))
    target = jnp.where(ignore_mask, IGNORE_INDEX, target)

    loss = jax.block_until_ready(focal_loss(output, target))
    ref = _focal_loss_ref(output, target)
    assert jnp.allclose(loss, ref, rtol=1e-3, atol=1e-5), (loss, ref)

    print("KERNEL_OK")
</pallas_src>

<mosaic_0001>
module attributes {stable_mosaic.version = 11 : i64} {
  func.func @_focal_loss_kernel(%arg0: i32, %arg1: i32, %arg2: i32, %arg3: memref<1x4x2x128xf32, #tpu.memory_space<vmem>>, %arg4: memref<1x2x128xi32, #tpu.memory_space<vmem>>, %arg5: memref<1x1x2x128xf32, #tpu.memory_space<vmem>>) attributes {dimension_semantics = [#tpu.dimension_semantics<parallel>, #tpu.dimension_semantics<parallel>, #tpu.dimension_semantics<arbitrary>], iteration_bounds = array<i64: 2, 1, 1>, scalar_prefetch = 0 : i64, scratch_operands = 0 : i64, tpu.core_type = #tpu.core_type<tc>, window_params = [{transform_indices = @transform_0, window_bounds = array<i64: 1, 4, 2, 128>}, {transform_indices = @transform_1, window_bounds = array<i64: 1, 2, 128>}, {transform_indices = @transform_2, window_bounds = array<i64: 1, 1, 2, 128>}]} {
    %c0_i32 = arith.constant 0 : i32
    %0 = arith.cmpi eq, %arg2, %c0_i32 : i32
    %1 = arith.extui %0 : i1 to i32
    %c0_i32_0 = arith.constant 0 : i32
    %2 = arith.cmpi ne, %1, %c0_i32_0 : i32
    scf.if %2 {
      %cst_53 = arith.constant 0.000000e+00 : f32
      %89 = vector.broadcast %cst_53 : f32 to vector<2x128xf32>
      %c0_54 = arith.constant 0 : index
      %c0_55 = arith.constant 0 : index
      %c0_56 = arith.constant 0 : index
      %c0_57 = arith.constant 0 : index
      %90 = vector.load %arg5[%c0_54, %c0_55, %c0_56, %c0_57] : memref<1x1x2x128xf32, #tpu.memory_space<vmem>>, vector<1x1x2x128xf32>
      %91 = vector.shape_cast %90 : vector<1x1x2x128xf32> to vector<2x128xf32>
      %92 = vector.shape_cast %89 : vector<2x128xf32> to vector<1x1x2x128xf32>
      tpu.vector_store %arg5[%c0_54, %c0_55, %c0_56, %c0_57], %92 {strides = array<i32>} : memref<1x1x2x128xf32, #tpu.memory_space<vmem>>, vector<1x1x2x128xf32>,
    } else {
    }
    %c0 = arith.constant 0 : index
    %c0_1 = arith.constant 0 : index
    %c0_2 = arith.constant 0 : index
    %3 = vector.load %arg4[%c0, %c0_1, %c0_2] : memref<1x2x128xi32, #tpu.memory_space<vmem>>, vector<1x2x128xi32>
    %4 = vector.shape_cast %3 : vector<1x2x128xi32> to vector<2x128xi32>
    %c0_3 = arith.constant 0 : index
    %c0_4 = arith.constant 0 : index
    %c0_5 = arith.constant 0 : index
    %c0_6 = arith.constant 0 : index
    %5 = vector.load %arg3[%c0_3, %c0_4, %c0_5, %c0_6] : memref<1x4x2x128xf32, #tpu.memory_space<vmem>>, vector<1x1x2x128xf32>
    %6 = vector.shape_cast %5 : vector<1x1x2x128xf32> to vector<2x128xf32>
    %c0_7 = arith.constant 0 : index
    %c1 = arith.constant 1 : index
    %c0_8 = arith.constant 0 : index
    %c0_9 = arith.constant 0 : index
    %7 = vector.load %arg3[%c0_7, %c1, %c0_8, %c0_9] : memref<1x4x2x128xf32, #tpu.memory_space<vmem>>, vector<1x1x2x128xf32>
    %8 = vector.shape_cast %7 : vector<1x1x2x128xf32> to vector<2x128xf32>
    %9 = arith.maximumf %6, %8 : vector<2x128xf32>
    %c0_10 = arith.constant 0 : index
    %c2 = arith.constant 2 : index
    %c0_11 = arith.constant 0 : index
    %c0_12 = arith.constant 0 : index
    %10 = vector.load %arg3[%c0_10, %c2, %c0_11, %c0_12] : memref<1x4x2x128xf32, #tpu.memory_space<vmem>>, vector<1x1x2x128xf32>
    %11 = vector.shape_cast %10 : vector<1x1x2x128xf32> to vector<2x128xf32>
    %12 = arith.maximumf %9, %11 : vector<2x128xf32>
    %c0_13 = arith.constant 0 : index
    %c3 = arith.constant 3 : index
    %c0_14 = arith.constant 0 : index
    %c0_15 = arith.constant 0 : index
    %13 = vector.load %arg3[%c0_13, %c3, %c0_14, %c0_15] : memref<1x4x2x128xf32, #tpu.memory_space<vmem>>, vector<1x1x2x128xf32>
    %14 = vector.shape_cast %13 : vector<1x1x2x128xf32> to vector<2x128xf32>
    %15 = arith.maximumf %12, %14 : vector<2x128xf32>
    %cst = arith.constant 0.000000e+00 : f32
    %16 = vector.broadcast %cst : f32 to vector<2x128xf32>
    %cst_16 = arith.constant 0.000000e+00 : f32
    %17 = vector.broadcast %cst_16 : f32 to vector<2x128xf32>
    %c0_17 = arith.constant 0 : index
    %c0_18 = arith.constant 0 : index
    %c0_19 = arith.constant 0 : index
    %c0_20 = arith.constant 0 : index
    %18 = vector.load %arg3[%c0_17, %c0_18, %c0_19, %c0_20] : memref<1x4x2x128xf32, #tpu.memory_space<vmem>>, vector<1x1x2x128xf32>
    %19 = vector.shape_cast %18 : vector<1x1x2x128xf32> to vector<2x128xf32>
    %20 = arith.subf %19, %15 : vector<2x128xf32>
    %21 = math.exp %20 : vector<2x128xf32>
    %22 = arith.addf %16, %21 : vector<2x128xf32>
    %c0_i32_21 = arith.constant 0 : i32
    %23 = vector.broadcast %c0_i32_21 : i32 to vector<2x128xi32>
    %24 = arith.cmpi eq, %4, %23 : vector<2x128xi32>
    %cst_22 = arith.constant 0.000000e+00 : f32
    %25 = vector.broadcast %cst_22 : f32 to vector<2x128xf32>
    %26 = arith.select %24, %19, %25 : vector<2x128xi1>, vector<2x128xf32>
    %27 = arith.addf %17, %26 : vector<2x128xf32>
    %c0_23 = arith.constant 0 : index
    %c1_24 = arith.constant 1 : index
    %c0_25 = arith.constant 0 : index
    %c0_26 = arith.constant 0 : index
    %28 = vector.load %arg3[%c0_23, %c1_24, %c0_25, %c0_26] : memref<1x4x2x128xf32, #tpu.memory_space<vmem>>, vector<1x1x2x128xf32>
    %29 = vector.shape_cast %28 : vector<1x1x2x128xf32> to vector<2x128xf32>
    %30 = arith.subf %29, %15 : vector<2x128xf32>
    %31 = math.exp %30 : vector<2x128xf32>
    %32 = arith.addf %22, %31 : vector<2x128xf32>
    %c1_i32 = arith.constant 1 : i32
    %33 = vector.broadcast %c1_i32 : i32 to vector<2x128xi32>
    %34 = arith.cmpi eq, %4, %33 : vector<2x128xi32>
    %cst_27 = arith.constant 0.000000e+00 : f32
    %35 = vector.broadcast %cst_27 : f32 to vector<2x128xf32>
    %36 = arith.select %34, %29, %35 : vector<2x128xi1>, vector<2x128xf32>
    %37 = arith.addf %27, %36 : vector<2x128xf32>
    %c0_28 = arith.constant 0 : index
    %c2_29 = arith.constant 2 : index
    %c0_30 = arith.constant 0 : index
    %c0_31 = arith.constant 0 : index
    %38 = vector.load %arg3[%c0_28, %c2_29, %c0_30, %c0_31] : memref<1x4x2x128xf32, #tpu.memory_space<vmem>>, vector<1x1x2x128xf32>
    %39 = vector.shape_cast %38 : vector<1x1x2x128xf32> to vector<2x128xf32>
    %40 = arith.subf %39, %15 : vector<2x128xf32>
    %41 = math.exp %40 : vector<2x128xf32>
    %42 = arith.addf %32, %41 : vector<2x128xf32>
    %c2_i32 = arith.constant 2 : i32
    %43 = vector.broadcast %c2_i32 : i32 to vector<2x128xi32>
    %44 = arith.cmpi eq, %4, %43 : vector<2x128xi32>
    %cst_32 = arith.constant 0.000000e+00 : f32
    %45 = vector.broadcast %cst_32 : f32 to vector<2x128xf32>
    %46 = arith.select %44, %39, %45 : vector<2x128xi1>, vector<2x128xf32>
    %47 = arith.addf %37, %46 : vector<2x128xf32>
    %c0_33 = arith.constant 0 : index
    %c3_34 = arith.constant 3 : index
    %c0_35 = arith.constant 0 : index
    %c0_36 = arith.constant 0 : index
    %48 = vector.load %arg3[%c0_33, %c3_34, %c0_35, %c0_36] : memref<1x4x2x128xf32, #tpu.memory_space<vmem>>, vector<1x1x2x128xf32>
    %49 = vector.shape_cast %48 : vector<1x1x2x128xf32> to vector<2x128xf32>
    %50 = arith.subf %49, %15 : vector<2x128xf32>
    %51 = math.exp %50 : vector<2x128xf32>
    %52 = arith.addf %42, %51 : vector<2x128xf32>
    %c3_i32 = arith.constant 3 : i32
    %53 = vector.broadcast %c3_i32 : i32 to vector<2x128xi32>
    %54 = arith.cmpi eq, %4, %53 : vector<2x128xi32>
    %cst_37 = arith.constant 0.000000e+00 : f32
    %55 = vector.broadcast %cst_37 : f32 to vector<2x128xf32>
    %56 = arith.select %54, %49, %55 : vector<2x128xi1>, vector<2x128xf32>
    %57 = arith.addf %47, %56 : vector<2x128xf32>
    %58 = math.log %52 : vector<2x128xf32>
    %59 = arith.addf %58, %15 : vector<2x128xf32>
    %60 = arith.subf %59, %57 : vector<2x128xf32>
    %cst_38 = arith.constant 0.000000e+00 : f32
    %61 = vector.broadcast %cst_38 : f32 to vector<2x128xf32>
    %62 = arith.subf %61, %60 : vector<2x128xf32>
    %63 = math.exp %62 : vector<2x128xf32>
    %cst_39 = arith.constant 1.000000e+00 : f32
    %64 = vector.broadcast %cst_39 : f32 to vector<2x128xf32>
    %65 = arith.subf %64, %63 : vector<2x128xf32>
    %cst_40 = arith.constant 1.000000e+00 : f32
    %66 = vector.broadcast %cst_40 : f32 to vector<2x128xf32>
    %67 = arith.subf %66, %63 : vector<2x128xf32>
    %68 = arith.mulf %65, %67 : vector<2x128xf32>
    %c1_i32_41 = arith.constant 1 : i32
    %69 = arith.muli %arg1, %c1_i32_41 : i32
    %70 = arith.addi %69, %arg2 : i32
    %c2_i32_42 = arith.constant 2 : i32
    %71 = arith.muli %70, %c2_i32_42 : i32
    %72 = tpu.iota {dimensions = array<i32: 0>} : vector<2x128xi32>
    %73 = vector.broadcast %71 : i32 to vector<2x128xi32>
    %74 = arith.addi %73, %72 : vector<2x128xi32>
    %c2_i32_43 = arith.constant 2 : i32
    %75 = vector.broadcast %c2_i32_43 : i32 to vector<2x128xi32>
    %76 = arith.cmpi slt, %74, %75 : vector<2x128xi32>
    %c255_i32 = arith.constant 255 : i32
    %77 = vector.broadcast %c255_i32 : i32 to vector<2x128xi32>
    %78 = arith.cmpi ne, %4, %77 : vector<2x128xi32>
    %79 = arith.andi %76, %78 : vector<2x128xi1>
    %c0_44 = arith.constant 0 : index
    %c0_45 = arith.constant 0 : index
    %c0_46 = arith.constant 0 : index
    %c0_47 = arith.constant 0 : index
    %80 = vector.load %arg5[%c0_44, %c0_45, %c0_46, %c0_47] : memref<1x1x2x128xf32, #tpu.memory_space<vmem>>, vector<1x1x2x128xf32>
    %81 = vector.shape_cast %80 : vector<1x1x2x128xf32> to vector<2x128xf32>
    %82 = arith.mulf %68, %60 : vector<2x128xf32>
    %cst_48 = arith.constant 0.000000e+00 : f32
    %83 = vector.broadcast %cst_48 : f32 to vector<2x128xf32>
    %84 = arith.select %79, %82, %83 : vector<2x128xi1>, vector<2x128xf32>
    %85 = arith.addf %81, %84 : vector<2x128xf32>
    %c0_49 = arith.constant 0 : index
    %c0_50 = arith.constant 0 : index
    %c0_51 = arith.constant 0 : index
    %c0_52 = arith.constant 0 : index
    %86 = vector.load %arg5[%c0_49, %c0_50, %c0_51, %c0_52] : memref<1x1x2x128xf32, #tpu.memory_space<vmem>>, vector<1x1x2x128xf32>
    %87 = vector.shape_cast %86 : vector<1x1x2x128xf32> to vector<2x128xf32>
    %88 = vector.shape_cast %85 : vector<2x128xf32> to vector<1x1x2x128xf32>
    tpu.vector_store %arg5[%c0_49, %c0_50, %c0_51, %c0_52], %88 {strides = array<i32>} : memref<1x1x2x128xf32, #tpu.memory_space<vmem>>, vector<1x1x2x128xf32>,
    return
  }
  func.func @transform_0(%arg0: i32, %arg1: i32, %arg2: i32) -> (i32, i32, i32, i32) {
    %c1_i32 = arith.constant 1 : i32
    %0 = arith.muli %arg1, %c1_i32 : i32
    %1 = arith.addi %0, %arg2 : i32
    %c0_i32 = arith.constant 0 : i32
    %2 = arith.minsi %1, %c0_i32 : i32
    %c0_i32_0 = arith.constant 0 : i32
    %c0_i32_1 = arith.constant 0 : i32
    %c0_i32_2 = arith.constant 0 : i32
    return %arg0, %c0_i32_0, %2, %c0_i32_1 : i32, i32, i32, i32
  }
  func.func @transform_1(%arg0: i32, %arg1: i32, %arg2: i32) -> (i32, i32, i32) {
    %c1_i32 = arith.constant 1 : i32
    %0 = arith.muli %arg1, %c1_i32 : i32
    %1 = arith.addi %0, %arg2 : i32
    %c0_i32 = arith.constant 0 : i32
    %2 = arith.minsi %1, %c0_i32 : i32
    %c0_i32_0 = arith.constant 0 : i32
    %c0_i32_1 = arith.constant 0 : i32
    return %arg0, %2, %c0_i32_0 : i32, i32, i32
  }
  func.func @transform_2(%arg0: i32, %arg1: i32, %arg2: i32) -> (i32, i32, i32, i32) {
    %c0_i32 = arith.constant 0 : i32
    %c0_i32_0 = arith.constant 0 : i32
    %c0_i32_1 = arith.constant 0 : i32
    return %arg0, %arg1, %c0_i32, %c0_i32_0 : i32, i32, i32, i32
  }
}

</mosaic_0001>

<llo_original>
// kernel: tpu_custom_call.1
$region0: #{tpu_custom_call.1}
  #allocation0 [shape = 'u32[]', space=smem, size = 0x4, offset = 0x4, fixed_abs, tag = 'smem constant byte address 0x4 - core index']
  #allocation1 [shape = 'u32[72,128]{1,0:T(1,128)}', space=vmem, size = 0x9000, scoped, tag = 'internal scratch']
  %s0 = inlined_call_operand.hbm [shape: f32[2,4,2,128], index: 0, kind: input, shape index: {}]
  %s1 = inlined_call_operand.hbm [shape: s32[2,2,128], index: 1, kind: input, shape index: {}]
  %s2 = inlined_call_operand.hbm [shape: f32[2,1,2,128], index: 2, kind: output, shape index: {}]
  %s3 = sld [smem:[#allocation0]]
  $region53: #{tpu_custom_call.1} parent=0
    _
  %s5 = ssub.s32 1, %s3
  %s6 = scalar_select 0, %s5, %s3
  $region1: #{tpu_custom_call.1} parent=0
    #allocation2 [shape = 'u8[8192]{0}', space=vmem, size = 0x2000, scoped, tag = 'input window, operand 0']
    #allocation3 [shape = 's32[2]{0}', space=sflag, size = 0x8, scoped, tag = 'scoped memory for tpu_custom_call.1']
    #allocation4 [shape = 's32[2]{0}', space=sflag, size = 0x8, scoped, tag = 'scoped memory for tpu_custom_call.1']
    #allocation5 [shape = 'u8[2048]{0}', space=vmem, size = 0x800, scoped, tag = 'input window, operand 1']
    #allocation6 [shape = 's32[2]{0}', space=sflag, size = 0x8, scoped, tag = 'scoped memory for tpu_custom_call.1']
    #allocation7 [shape = 'u8[2048]{0}', space=vmem, size = 0x800, scoped, tag = 'output window, operand 0']
    %7 = vsyncpa [#allocation3], 0
    %s8 = scalar_lea.sflag [#allocation3], 1
    %9 = vsyncpa %s8, 0
    %10 = vsyncpa [#allocation6], 0
    %s11 = scalar_lea.sflag [#allocation6], 1
    %12 = vsyncpa %s11, 0
    %13 = vsyncpa [#allocation4], 0
    %s14 = scalar_lea.sflag [#allocation4], 1
    %15 = vsyncpa %s14, 0
    loop: start=0, step=1, limit=4
    $region2: #{tpu_custom_call.1} parent=1 // loop_pre_header
      _
    $region3: #{tpu_custom_call.1} parent=1 // loop_header
      %s17 = sphi 0, %s21
      %p18 = scmp.ge.s32.totalorder %s17, 4
      %s24 = sphi 0, %s43
      %s25 = sphi 0, %s39
      %s26 = sphi 0, %s35
      %s27 = sphi 0, %s24
      %s28 = sphi 0, %s25
      %s29 = sphi 0, %s26
      %s30 = sphi 0, %s27
      %s31 = sphi 0, %s28
      %s32 = sphi 0, %s29
      %s54 = sphi 0, %s56
      %s57 = sphi 0, %s54
      %s58 = sphi 0, %s57
      %s74 = sphi 0, %s58
      %s88 = sphi 0, %s90
      %s91 = sphi 0, %s88
      %s92 = sphi 0, %s91
      %s108 = sphi 0, %s92
      %s116 = sphi 0, %s118
      %s119 = sphi 0, %s116
      %s120 = sphi 0, %s119
      %s136 = sphi 0, %s120
    $region4: #{tpu_custom_call.1} parent=1 // loop_header_branch
      %20 = sbr.rel (%p18) target = $region8
    $region5: #{tpu_custom_call.1} parent=1 // loop_body
      %s22 = ssub.s32 %s17, 1
      %s23 = ssub.s32 %s17, 2
      %s33 = sadd.s32 1, %s26
      %p34 = scmp.ge.s32.totalorder %s33, 1
      %s35 = scalar_select %p34, 0, %s33
      %s36 = sadd.s32 1, %s25
      %s37 = scalar_select %p34, %s36, %s25
      %p38 = scmp.ge.s32.totalorder %s37, 1
      %s39 = scalar_select %p38, 0, %s37
      %s40 = sadd.s32 1, %s24
      %s41 = scalar_select %p38, %s40, %s24
      %p42 = scmp.ge.s32.totalorder %s41, 2
      %s43 = scalar_select %p42, 0, %s41
      %s44 = sadd.s32 %s25, %s26
      %p45 = scmp.lt.s32.totalorder %s44, 0
      %s46 = scalar_select %p45, %s44, 0
      %s47 = sadd.s32 %s39, %s35
      %p48 = scmp.lt.s32.totalorder %s47, 0
      %s49 = scalar_select %p48, %s47, 0
      %s50 = ssub.s32 %s24, %s43
      %s51 = ssub.s32 %s46, %s49
      %s52 = sor.u32 %s50, %s51
      %p53 = scmp.eq.s32.totalorder %s52, 0
      %s55 = sadd.s32 %s54, 1
      %s56 = scalar_select %p53, %s54, %s55
      %p59 = pneg %p53
      %p60 = scmp.eq.s32.totalorder %s17, 1
      %p61 = por %p59, %p60
      %p62 = scmp.ne.s32.totalorder %s54, %s57
      %p63 = scmp.eq.s32.totalorder %s17, 0
      %p64 = por %p62, %p63
      %p65 = scmp.ne.s32.totalorder %s54, %s57
      %p66 = scmp.eq.s32.totalorder %s22, 1
      %p67 = por %p65, %p66
      %p68 = scmp.ne.s32.totalorder %s57, %s58
      %p69 = scmp.eq.s32.totalorder %s22, 0
      %p70 = por %p68, %p69
      %p71 = scmp.ne.s32.totalorder %s57, %s58
      %p72 = scmp.eq.s32.totalorder %s23, 1
      %p73 = por %p71, %p72
      %p75 = scmp.ne.s32.totalorder %s58, %s74
      %p76 = scmp.eq.s32.totalorder %s23, 0
      %p77 = por %p75, %p76
      %s78 = sadd.s32 %s25, %s26
      %p79 = scmp.lt.s32.totalorder %s78, 0
      %s80 = scalar_select %p79, %s78, 0
      %s81 = sadd.s32 %s39, %s35
      %p82 = scmp.lt.s32.totalorder %s81, 0
      %s83 = scalar_select %p82, %s81, 0
      %s84 = ssub.s32 %s24, %s43
      %s85 = ssub.s32 %s80, %s83
      %s86 = sor.u32 %s84, %s85
      %p87 = scmp.eq.s32.totalorder %s86, 0
      %s89 = sadd.s32 %s88, 1
      %s90 = scalar_select %p87, %s88, %s89
      %p93 = pneg %p87
      %p94 = scmp.eq.s32.totalorder %s17, 1
      %p95 = por %p93, %p94
      %p96 = scmp.ne.s32.totalorder %s88, %s91
      %p97 = scmp.eq.s32.totalorder %s17, 0
      %p98 = por %p96, %p97
      %p99 = scmp.ne.s32.totalorder %s88, %s91
      %p100 = scmp.eq.s32.totalorder %s22, 1
      %p101 = por %p99, %p100
      %p102 = scmp.ne.s32.totalorder %s91, %s92
      %p103 = scmp.eq.s32.totalorder %s22, 0
      %p104 = por %p102, %p103
      %p105 = scmp.ne.s32.totalorder %s91, %s92
      %p106 = scmp.eq.s32.totalorder %s23, 1
      %p107 = por %p105, %p106
      %p109 = scmp.ne.s32.totalorder %s92, %s108
      %p110 = scmp.eq.s32.totalorder %s23, 0
      %p111 = por %p109, %p110
      %s112 = ssub.s32 %s24, %s43
      %s113 = ssub.s32 %s25, %s39
      %s114 = sor.u32 %s112, %s113
      %p115 = scmp.eq.s32.totalorder %s114, 0
      %s117 = sadd.s32 %s116, 1
      %s118 = scalar_select %p115, %s116, %s117
      %p121 = pneg %p115
      %p122 = scmp.eq.s32.totalorder %s17, 1
      %p123 = por %p121, %p122
      %p124 = scmp.ne.s32.totalorder %s116, %s119
      %p125 = scmp.eq.s32.totalorder %s17, 0
      %p126 = por %p124, %p125
      %p127 = scmp.ne.s32.totalorder %s116, %s119
      %p128 = scmp.eq.s32.totalorder %s22, 1
      %p129 = por %p127, %p128
      %p130 = scmp.ne.s32.totalorder %s119, %s120
      %p131 = scmp.eq.s32.totalorder %s22, 0
      %p132 = por %p130, %p131
      %p133 = scmp.ne.s32.totalorder %s119, %s120
      %p134 = scmp.eq.s32.totalorder %s23, 1
      %p135 = por %p133, %p134
      %p137 = scmp.ne.s32.totalorder %s120, %s136
      %p138 = scmp.eq.s32.totalorder %s23, 0
      %p139 = por %p137, %p138
      %p140 = scmp.le.s32.totalorder 1, %s17
      %p141 = scmp.lt.s32.totalorder %s17, 3
      %p142 = pnand %p140, %p141
      %p143 = pneg %p142
      // Predicated region
      $region9: #{tpu_custom_call.1} parent=5 // pred_check
        _
      $region10: #{tpu_custom_call.1} parent=5 // pred_check_branch
        %145 = sbr.rel (%p142) target = $region12
      $region11: #{tpu_custom_call.1} parent=5 // pred_region
        %s146 = ssub.s32 %s17, 1
      $region12: #{tpu_custom_call.1} parent=5 // pred_fallthru
        _
      %p147 = scmp.lt.s32.totalorder %s17, 2
      // Predicated region
      $region13: #{tpu_custom_call.1} parent=5 // pred_check
        %p148 = pneg %p147
      $region14: #{tpu_custom_call.1} parent=5 // pred_check_branch
        %150 = sbr.rel (%p148) target = $region16
      $region15: #{tpu_custom_call.1} parent=5 // pred_region
        // Predicated region
        $region17: #{tpu_custom_call.1} parent=15 // pred_check
          %p151 = pneg %p64
        $region18: #{tpu_custom_call.1} parent=15 // pred_check_branch
          %153 = sbr.rel (%p151) target = $region20
        $region19: #{tpu_custom_call.1} parent=15 // pred_region
          %s154 = sand.u32 %s54, 1
          %s155 = scalar_lea.sflag [#allocation3], %s154
          %s156 = sand.u32 %s54, 1
          %s157 = smul.addr %s156, 8
          %s158 = scalar_lea.vmem [#allocation2], %s157
          %s159 = sadd.s32 %s25, %s26
          %p160 = scmp.lt.s32.totalorder %s159, 0
          %s161 = scalar_select %p160, %s159, 0
          %163 = vsyncadd %s155, 0
          %s164 = smul.addr %s24, 4
          %s165 = sadd.s32 %s161, %s164
          %s166 = smul.addr %s165, 2
          %s167 = scalar_lea.hbm %s0, %s166
          %s168 = sshll.u32 %s167, 4
          %s169 = int_to_ptr.hbm [resolvable:$true] %s168
          %s170 = sshll.u32 %s158, 4
          %s171 = int_to_ptr.vmem [resolvable:$true] %s170
          %176 = dma.hbm_to_vmem [thread:$0]  %s169, 128, %s171, %s155, 32, 32, 2
        $region20: #{tpu_custom_call.1} parent=15 // pred_fallthru
          _
        // Predicated region
        $region21: #{tpu_custom_call.1} parent=15 // pred_check
          %p177 = pneg %p98
        $region22: #{tpu_custom_call.1} parent=15 // pred_check_branch
          %179 = sbr.rel (%p177) target = $region24
        $region23: #{tpu_custom_call.1} parent=15 // pred_region
          %s180 = sand.u32 %s88, 1
          %s181 = scalar_lea.sflag [#allocation6], %s180
          %s182 = sand.u32 %s88, 1
          %s183 = smul.addr %s182, 2
          %s184 = scalar_lea.vmem [#allocation5], %s183
          %s185 = sadd.s32 %s25, %s26
          %p186 = scmp.lt.s32.totalorder %s185, 0
          %s187 = scalar_select %p186, %s185, 0
          %189 = vsyncadd %s181, 0
          %s190 = sadd.s32 %s187, %s24
          %s191 = smul.addr %s190, 2
          %s192 = scalar_lea.hbm %s1, %s191
          %s194 = sshll.u32 %s192, 4
          %s195 = int_to_ptr.hbm [resolvable:$true] %s194
          %s196 = sshll.u32 %s184, 4
          %s197 = int_to_ptr.vmem [resolvable:$true] %s196
          %199 = dma.hbm_to_vmem [thread:$0]  %s195, 32, %s197, %s181
        $region24: #{tpu_custom_call.1} parent=15 // pred_fallthru
          _
      $region16: #{tpu_custom_call.1} parent=5 // pred_fallthru
        _
      %p200 = scmp.le.s32.totalorder 1, %s17
      %p201 = scmp.lt.s32.totalorder %s17, 3
      %p202 = pnand %p200, %p201
      %p203 = pneg %p202
      // Predicated region
      $region25: #{tpu_custom_call.1} parent=5 // pred_check
        _
      $region26: #{tpu_custom_call.1} parent=5 // pred_check_branch
        %205 = sbr.rel (%p202) target = $region28
      $region27: #{tpu_custom_call.1} parent=5 // pred_region
        %s206 = ssub.s32 %s17, 1
        %s207 = sand.u32 %s57, 1
        %s208 = scalar_lea.sflag [#allocation3], %s207
        %s209 = sand.u32 %s57, 1
        %s210 = smul.addr %s209, 8
        %s211 = scalar_lea.vmem [#allocation2], %s210
        // Predicated region
        $region29: #{tpu_custom_call.1} parent=27 // pred_check
          %p212 = pneg %p70
        $region30: #{tpu_custom_call.1} parent=27 // pred_check_branch
          %214 = sbr.rel (%p212) target = $region32
        $region31: #{tpu_custom_call.1} parent=27 // pred_region
          %216 = dma.done %s208, 128
        $region32: #{tpu_custom_call.1} parent=27 // pred_fallthru
          _
        %s217 = sand.u32 %s91, 1
        %s218 = scalar_lea.sflag [#allocation6], %s217
        %s219 = sand.u32 %s91, 1
        %s220 = smul.addr %s219, 2
        %s221 = scalar_lea.vmem [#allocation5], %s220
        // Predicated region
        $region33: #{tpu_custom_call.1} parent=27 // pred_check
          %p222 = pneg %p104
        $region34: #{tpu_custom_call.1} parent=27 // pred_check_branch
          %224 = sbr.rel (%p222) target = $region36
        $region35: #{tpu_custom_call.1} parent=27 // pred_region
          %226 = dma.done %s218, 32
        $region36: #{tpu_custom_call.1} parent=27 // pred_fallthru
          _
        %s227 = sand.u32 %s57, 1
        %s228 = scalar_lea.sflag [#allocation3], %s227
        %s229 = sand.u32 %s57, 1
        %s230 = smul.addr %s229, 8
        %s231 = scalar_lea.vmem [#allocation2], %s230
        %p232 = pneg %p70
        %p233 = pneg %p67
        %s234 = sand.u32 %s91, 1
        %s235 = scalar_lea.sflag [#allocation6], %s234
        %s236 = sand.u32 %s91, 1
        %s237 = smul.addr %s236, 2
        %s238 = scalar_lea.vmem [#allocation5], %s237
        %p239 = pneg %p104
        %p240 = pneg %p101
        %p241 = pneg %p132
        %p242 = pneg %p129
        %s243 = sand.u32 %s119, 1
        %s244 = scalar_lea.sflag [#allocation4], %s243
        %s245 = sand.u32 %s119, 1
        %s246 = smul.addr %s245, 2
        %s247 = scalar_lea.vmem [#allocation7], %s246
        %s248 = sadd.s32 %s28, %s29
        %p249 = scmp.lt.s32.totalorder %s248, 0
        %s250 = scalar_select %p249, %s248, 0
        %s251 = sadd.s32 %s28, %s29
        %p252 = scmp.lt.s32.totalorder %s251, 0
        %s253 = scalar_select %p252, %s251, 0
        %p254 = scmp.eq.s32.totalorder %s29, 0
        // Predicated region
        $region37: #{tpu_custom_call.1} parent=27 // pred_check
          %p255 = pneg %p254
        $region38: #{tpu_custom_call.1} parent=27 // pred_check_branch
          %257 = sbr.rel (%p255) target = $region40
        $region39: #{tpu_custom_call.1} parent=27 // pred_region
          %258 = vst [vmem:[%s247] sm:$0x3] 0.0
        $region40: #{tpu_custom_call.1} parent=27 // pred_fallthru
          _
        %v259 = vld [vmem:[%s221] sm:$0x3]
        %v260 = vld [vmem:[%s211] sm:$0x3]
        %s261 = scalar_lea.vmem %s211, 2 [#allocation2]
        %v262 = vld [vmem:[%s261] sm:$0x3]
        %v263 = vmax.f32 %v260, %v262
        %s264 = scalar_lea.vmem %s211, 4 [#allocation2]
        %v265 = vld [vmem:[%s264] sm:$0x3]
        %v266 = vmax.f32 %v263, %v265
        %s267 = scalar_lea.vmem %s211, 6 [#allocation2]
        %v268 = vld [vmem:[%s267] sm:$0x3]
        %v269 = vmax.f32 %v266, %v268
        %v270 = vsub.f32 %v260, %v269
        %v271 = vmul.f32 %v270, 1.442695
        %v272 = vpow.pop %v271
        %v273 = vadd.f32 %v272, 0.0
        %vm274 = vcmp.eq.s32.totalorder %v259, 0
        %v275 = vsel %vm274, %v260, 0.0
        %v276 = vadd.f32 %v275, 0.0
        %v277 = vsub.f32 %v262, %v269
        %v278 = vmul.f32 %v277, 1.442695
        %v279 = vpow.pop %v278
        %v280 = vadd.f32 %v273, %v279
        %vm281 = vcmp.eq.s32.totalorder %v259, 1
        %v282 = vsel %vm281, %v262, 0.0
        %v283 = vadd.f32 %v276, %v282
        %v284 = vsub.f32 %v265, %v269
        %v285 = vmul.f32 %v284, 1.442695
        %v286 = vpow.pop %v285
        %v287 = vadd.f32 %v280, %v286
        %vm288 = vcmp.eq.s32.totalorder %v259, 2
        %v289 = vsel %vm288, %v265, 0.0
        %v290 = vadd.f32 %v283, %v289
        %v291 = vsub.f32 %v268, %v269
        %v292 = vmul.f32 %v291, 1.442695
        %v293 = vpow.pop %v292
        %v294 = vadd.f32 %v287, %v293
        %vm295 = vcmp.eq.s32.totalorder %v259, 3
        %v296 = vsel %vm295, %v268, 0.0
        %v297 = vadd.f32 %v290, %v296
        %v298 = vlog2.pop %v294
        %v299 = vmul.f32 %v298, 0.6931472
        %v300 = vadd.f32 %v299, %v269
        %v301 = vsub.f32 %v300, %v297
        %v302 = vsub.f32 0.0, %v301
        %v303 = vmul.f32 %v302, 1.442695
        %v304 = vpow.pop %v303
        %v305 = vsub.f32 1.0, %v304
        %v306 = vmul.f32 %v305, %v305
        %s307 = sadd.s32 %s28, %s29
        %s308 = smul.u32 %s307, 2
        %v309 = vlaneseq
        %v310 = vshrl.u32 %v309, 7
        %v311 = vstv %s308
        %v312 = vadd.s32 %v311, %v310
        %vm313 = vcmp.lt.s32.totalorder %v312, 2
        %vm314 = vcmp.ne.s32.totalorder %v259, 255
        %vm315 = vmand %vm313, %vm314
        %v316 = vld [vmem:[%s247] sm:$0x3]
        %v317 = vmul.f32 %v306, %v301
        %v318 = vsel %vm315, %v317, 0.0
        %v319 = vadd.f32 %v316, %v318
        %320 = vst [vmem:[%s247] sm:$0x3] %v319
        %s321 = sand.u32 %s119, 1
        %s322 = scalar_lea.sflag [#allocation4], %s321
        %s323 = sand.u32 %s119, 1
        %s324 = smul.addr %s323, 2
        %s325 = scalar_lea.vmem [#allocation7], %s324
        // Predicated region
        $region41: #{tpu_custom_call.1} parent=27 // pred_check
          %p326 = pneg %p129
        $region42: #{tpu_custom_call.1} parent=27 // pred_check_branch
          %328 = sbr.rel (%p326) target = $region44
        $region43: #{tpu_custom_call.1} parent=27 // pred_region
          %330 = vsyncadd %s322, 0
          %s331 = sadd.s32 %s28, %s27
          %s332 = smul.addr %s331, 2
          %s333 = scalar_lea.hbm %s2, %s332
          %s335 = sshll.u32 %s325, 4
          %s336 = int_to_ptr.vmem [resolvable:$true] %s335
          %s337 = sshll.u32 %s333, 4
          %s338 = int_to_ptr.hbm [resolvable:$true] %s337
          %340 = dma.vmem_to_hbm [thread:$0]  %s336, 32, %s338, %s322
        $region44: #{tpu_custom_call.1} parent=27 // pred_fallthru
          _
      $region28: #{tpu_custom_call.1} parent=5 // pred_fallthru
        _
      %p341 = scmp.le.s32.totalorder 2, %s17
      // Predicated region
      $region45: #{tpu_custom_call.1} parent=5 // pred_check
        %p342 = pneg %p341
      $region46: #{tpu_custom_call.1} parent=5 // pred_check_branch
        %344 = sbr.rel (%p342) target = $region48
      $region47: #{tpu_custom_call.1} parent=5 // pred_region
        %s345 = ssub.s32 %s17, 2
        // Predicated region
        $region49: #{tpu_custom_call.1} parent=47 // pred_check
          %p346 = pneg %p135
        $region50: #{tpu_custom_call.1} parent=47 // pred_check_branch
          %348 = sbr.rel (%p346) target = $region52
        $region51: #{tpu_custom_call.1} parent=47 // pred_region
          %s349 = sand.u32 %s120, 1
          %s350 = scalar_lea.sflag [#allocation4], %s349
          %s351 = sand.u32 %s120, 1
          %s352 = smul.addr %s351, 2
          %s353 = scalar_lea.vmem [#allocation7], %s352
          %355 = dma.done %s350, 32
        $region52: #{tpu_custom_call.1} parent=47 // pred_fallthru
          _
      $region48: #{tpu_custom_call.1} parent=5 // pred_fallthru
        _
    $region6: #{tpu_custom_call.1} parent=1 // loop_footer
      %s21 = sadd.s32 1, %s17
    $region7: #{tpu_custom_call.1} parent=1 // loop_footer_branch
      %16 = sbr.rel target = $region3
    $region8: #{tpu_custom_call.1} parent=1 // loop_exit
      _
    %356 = vsyncpa [#allocation3], 1
    %s357 = scalar_lea.sflag [#allocation3], 1
    %358 = vsyncpa %s357, 1
    %359 = vsyncpa [#allocation6], 1
    %s360 = scalar_lea.sflag [#allocation6], 1
    %361 = vsyncpa %s360, 1
    %362 = vsyncpa [#allocation4], 1
    %s363 = scalar_lea.sflag [#allocation4], 1
    %364 = vsyncpa %s363, 1

</llo_original>
